<compile_context>
chip_gen: v7x
topology: tpu7x:2x2x1
jax: 0.10.0
libtpu: 0.0.40
codegen_flags: <defaults>
</compile_context>

<pallas_src>
import jax
import jax.numpy as jnp
from jax.experimental import pallas as pl
from jax.experimental.pallas import tpu as pltpu

_NEG_INF = -1e18


def _pooling_kernel(x_ref, w_ref, mb_ref, o_ref):
    # x_ref : (Bt, S, D)  input slab
    # w_ref : (1, D)      linear_keys weight row
    # mb_ref: (Bt, S, 1)  additive mask bias (0 = keep, -1e18 = masked)
    # o_ref : (Bt, 1, D)  pooled output
    x = x_ref[...].astype(jnp.float32)                            # (Bt, S, D)
    w = w_ref[...].astype(jnp.float32)                            # (1, D)

    # scores[b, s] = <x[b, s, :], w>  -- VPU multiply + XLU lane reduce
    # (no N=1 MXU matmul).  The Linear bias is omitted: softmax is
    # shift-invariant, so it cannot change the output.
    scores = jnp.sum(x * w[None, :, :], axis=-1, keepdims=True)   # (Bt, S, 1)
    scores = scores + mb_ref[...]                                 # masked_fill as add

    # Numerically-stable softmax over the sequence axis; the normalization is
    # folded into the final scale (one reciprocal per batch row).
    s_max = jnp.max(scores, axis=1, keepdims=True)                # (Bt, 1, 1)
    e = jnp.exp(scores - s_max)                                   # (Bt, S, 1)
    denom = jnp.sum(e, axis=1, keepdims=True)                     # (Bt, 1, 1)

    num = jnp.sum(e * x, axis=1, keepdims=True)                   # (Bt, 1, D)
    o_ref[...] = (num * pl.reciprocal(denom)).astype(o_ref.dtype)


def _choose_block_batch(B, S, D, itemsize, target_bytes=4 << 20):
    """How many batch rows per grid step (~4 MiB per pipeline buffer)."""
    s_pad = -(-S // 8) * 8
    # Per-batch-row VMEM footprint of one buffer:
    #   x tile + mask tile (trailing dim padded to 128 lanes) + output row.
    row_bytes = S * D * itemsize + s_pad * 128 * 4 + max(D, 128) * itemsize
    bt = max(1, target_bytes // row_bytes)
    return int(min(bt, B))


def multi_headed_pooling(x, weight, bias=None, mask=None, block_batch=None):
    """Pallas forward of MultiHeadedPooling.

    x:      (B, S, D) float array
    weight: nn.Linear(model_dim, 1) weight (any shape with D elements)
    bias:   accepted for API parity but unused -- softmax shift-invariance
            makes it a provable no-op on the output
    mask:   optional (B, S) bool, True = keep
    """
    del bias
    B, S, D = x.shape
    itemsize = jnp.dtype(x.dtype).itemsize
    w_row = jnp.asarray(weight, dtype=jnp.float32).reshape(1, D)

    if mask is None:
        mask_bias = jnp.zeros((B, S, 1), dtype=jnp.float32)
    else:
        mask_bias = jnp.where(mask, 0.0, _NEG_INF).astype(jnp.float32)[..., None]

    bt = block_batch if block_batch is not None else _choose_block_batch(
        B, S, D, itemsize)
    n_blocks = -(-B // bt)
    Bp = n_blocks * bt
    if Bp != B:
        # Zero-pad the batch axis so the grid tiles it exactly; padded rows
        # yield zeros (uniform softmax over zero inputs) and are sliced off.
        x = jnp.pad(x, ((0, Bp - B), (0, 0), (0, 0)))
        mask_bias = jnp.pad(mask_bias, ((0, Bp - B), (0, 0), (0, 0)))

    # VMEM budget: double-buffered x / mask / out tiles + weight + slack.
    s_pad = -(-S // 8) * 8
    tile_bytes = bt * (S * D * itemsize + s_pad * 128 * 4 + max(D, 128) * itemsize)
    vmem_limit = int(min(48 << 20, max(16 << 20, 2 * tile_bytes + (4 << 20))))

    out = pl.pallas_call(
        _pooling_kernel,
        out_shape=jax.ShapeDtypeStruct((Bp, 1, D), x.dtype),
        grid_spec=pltpu.PrefetchScalarGridSpec(
            num_scalar_prefetch=0,
            grid=(n_blocks,),
            in_specs=[
                pl.BlockSpec((bt, S, D), lambda b: (b, 0, 0)),   # x slab
                pl.BlockSpec((1, D), lambda b: (0, 0)),          # weight row
                pl.BlockSpec((bt, S, 1), lambda b: (b, 0, 0)),   # mask bias
            ],
            out_specs=pl.BlockSpec((bt, 1, D), lambda b: (b, 0, 0)),
        ),
        compiler_params=pltpu.CompilerParams(
            dimension_semantics=("parallel",),
            vmem_limit_bytes=vmem_limit,
        ),
    )(x, w_row, mask_bias)
    return out.reshape(Bp, D)[:B]


def _reference(x, weight, bias, mask=None):
    w = jnp.asarray(weight, dtype=jnp.float32).reshape(-1)
    scores = jnp.einsum('bsd,d->bs', x, w) + bias
    if mask is not None:
        scores = jnp.where(mask, scores, _NEG_INF)
    attn = jax.nn.softmax(scores, axis=-1)[..., None]
    return jnp.sum(attn * x, axis=-2)


if __name__ == "__main__":
    B, S, D = 2, 8, 32   # batch, seq, model_dim

    key = jax.random.PRNGKey(0)
    kx, kw, kb, km = jax.random.split(key, 4)

    x = jax.random.normal(kx, (B, S, D), dtype=jnp.float32)
    # nn.Linear(model_dim, 1): weight (1, D), bias scalar.
    weight = (jax.random.normal(kw, (1, D), dtype=jnp.float32)
              / jnp.sqrt(jnp.float32(D)))
    bias = jax.random.normal(kb, (), dtype=jnp.float32) * 0.1
    # deterministic mask with some masked-out positions (each row keeps >= 1)
    mask = jax.random.uniform(km, (B, S)) > 0.3
    mask = mask.at[:, 0].set(True)

    out = multi_headed_pooling(x, weight, bias, mask)
    out = jax.block_until_ready(out)
    ref = _reference(x, weight, bias, mask)
    assert out.shape == (B, D)
    assert jnp.allclose(out, ref, atol=1e-5, rtol=1e-5), (out, ref)

    # mask=None path
    out_nm = jax.block_until_ready(multi_headed_pooling(x, weight, bias, None))
    ref_nm = _reference(x, weight, bias, None)
    assert jnp.allclose(out_nm, ref_nm, atol=1e-5, rtol=1e-5), (out_nm, ref_nm)

    print("KERNEL_OK")
</pallas_src>

<mosaic_0001>
module attributes {stable_mosaic.version = 11 : i64} {
  func.func @_pooling_kernel(%arg0: i32, %arg1: memref<2x8x32xf32, #tpu.memory_space<vmem>>, %arg2: memref<1x32xf32, #tpu.memory_space<vmem>>, %arg3: memref<2x8x1xf32, #tpu.memory_space<vmem>>, %arg4: memref<2x1x32xf32, #tpu.memory_space<vmem>>) attributes {dimension_semantics = [#tpu.dimension_semantics<parallel>], iteration_bounds = array<i64: 1>, scalar_prefetch = 0 : i64, scratch_operands = 0 : i64, tpu.core_type = #tpu.core_type<tc>, window_params = [{transform_indices = @transform_0, window_bounds = array<i64: 2, 8, 32>}, {pipeline_mode = #tpu.pipeline_mode<synchronous>, transform_indices = @transform_1, window_bounds = array<i64: 1, 32>}, {transform_indices = @transform_2, window_bounds = array<i64: 2, 8, 1>}, {transform_indices = @transform_3, window_bounds = array<i64: 2, 1, 32>}]} {
    %c0 = arith.constant 0 : index
    %c0_0 = arith.constant 0 : index
    %c0_1 = arith.constant 0 : index
    %0 = vector.load %arg1[%c0, %c0_0, %c0_1] : memref<2x8x32xf32, #tpu.memory_space<vmem>>, vector<2x8x32xf32>
    %c0_2 = arith.constant 0 : index
    %c0_3 = arith.constant 0 : index
    %1 = vector.load %arg2[%c0_2, %c0_3] : memref<1x32xf32, #tpu.memory_space<vmem>>, vector<1x32xf32>
    %2 = vector.shape_cast %1 : vector<1x32xf32> to vector<1x1x32xf32>
    %3 = vector.broadcast %2 : vector<1x1x32xf32> to vector<2x8x32xf32>
    %4 = arith.mulf %0, %3 : vector<2x8x32xf32>
    %cst = arith.constant dense<0.000000e+00> : vector<2x8xf32>
    %5 = vector.multi_reduction <add>, %4, %cst [2] : vector<2x8x32xf32> to vector<2x8xf32>
    %6 = vector.shape_cast %5 : vector<2x8xf32> to vector<2x8x1xf32>
    %c0_4 = arith.constant 0 : index
    %c0_5 = arith.constant 0 : index
    %c0_6 = arith.constant 0 : index
    %7 = vector.load %arg3[%c0_4, %c0_5, %c0_6] : memref<2x8x1xf32, #tpu.memory_space<vmem>>, vector<2x8x1xf32>
    %8 = arith.addf %6, %7 : vector<2x8x1xf32>
    %cst_7 = arith.constant dense<0xFF800000> : vector<2x1xf32>
    %9 = vector.multi_reduction <maximumf>, %8, %cst_7 [1] : vector<2x8x1xf32> to vector<2x1xf32>
    %10 = vector.shape_cast %9 : vector<2x1xf32> to vector<2x1x1xf32>
    %11 = vector.broadcast %10 : vector<2x1x1xf32> to vector<2x8x1xf32>
    %12 = arith.subf %8, %11 : vector<2x8x1xf32>
    %13 = math.exp %12 : vector<2x8x1xf32>
    %cst_8 = arith.constant dense<0.000000e+00> : vector<2x1xf32>
    %14 = vector.multi_reduction <add>, %13, %cst_8 [1] : vector<2x8x1xf32> to vector<2x1xf32>
    %15 = vector.shape_cast %14 : vector<2x1xf32> to vector<2x1x1xf32>
    %16 = vector.broadcast %13 : vector<2x8x1xf32> to vector<2x8x32xf32>
    %17 = arith.mulf %16, %0 : vector<2x8x32xf32>
    %cst_9 = arith.constant dense<0.000000e+00> : vector<2x32xf32>
    %18 = vector.multi_reduction <add>, %17, %cst_9 [1] : vector<2x8x32xf32> to vector<2x32xf32>
    %19 = vector.shape_cast %18 : vector<2x32xf32> to vector<2x1x32xf32>
    %20 = tpu.reciprocal %15 : vector<2x1x1xf32> -> vector<2x1x1xf32>
    %21 = vector.broadcast %20 : vector<2x1x1xf32> to vector<2x1x32xf32>
    %22 = arith.mulf %19, %21 : vector<2x1x32xf32>
    %c0_10 = arith.constant 0 : index
    %c0_11 = arith.constant 0 : index
    %c0_12 = arith.constant 0 : index
    %23 = vector.load %arg4[%c0_10, %c0_11, %c0_12] : memref<2x1x32xf32, #tpu.memory_space<vmem>>, vector<2x1x32xf32>
    tpu.vector_store %arg4[%c0_10, %c0_11, %c0_12], %22 {strides = array<i32>} : memref<2x1x32xf32, #tpu.memory_space<vmem>>, vector<2x1x32xf32>,
    return
  }
  func.func @transform_0(%arg0: i32) -> (i32, i32, i32) {
    %c0_i32 = arith.constant 0 : i32
    %c0_i32_0 = arith.constant 0 : i32
    %c0_i32_1 = arith.constant 0 : i32
    return %arg0, %c0_i32, %c0_i32_0 : i32, i32, i32
  }
  func.func @transform_1(%arg0: i32) -> (i32, i32) {
    %c0_i32 = arith.constant 0 : i32
    %c0_i32_0 = arith.constant 0 : i32
    %c0_i32_1 = arith.constant 0 : i32
    return %c0_i32, %c0_i32_0 : i32, i32
  }
  func.func @transform_2(%arg0: i32) -> (i32, i32, i32) {
    %c0_i32 = arith.constant 0 : i32
    %c0_i32_0 = arith.constant 0 : i32
    %c0_i32_1 = arith.constant 0 : i32
    return %arg0, %c0_i32, %c0_i32_0 : i32, i32, i32
  }
  func.func @transform_3(%arg0: i32) -> (i32, i32, i32) {
    %c0_i32 = arith.constant 0 : i32
    %c0_i32_0 = arith.constant 0 : i32
    %c0_i32_1 = arith.constant 0 : i32
    return %arg0, %c0_i32, %c0_i32_0 : i32, i32, i32
  }
}

</mosaic_0001>

<llo_original>
// kernel: tpu_custom_call.1
$region0: #{tpu_custom_call.1}
  #allocation0 [shape = 'u32[]', space=smem, size = 0x4, offset = 0x4, fixed_abs, tag = 'smem constant byte address 0x4 - core index']
  #allocation1 [shape = 'u32[144,128]{1,0:T(1,128)}', space=vmem, size = 0x12000, scoped, tag = 'internal scratch']
  %s0 = inlined_call_operand.vmem [shape: f32[2,8,32], index: 0, kind: input, shape index: {}]
  %s1 = inlined_call_operand.vmem [shape: f32[1,32], index: 1, kind: input, shape index: {}]
  %s2 = inlined_call_operand.vmem [shape: f32[2,8,1], index: 2, kind: input, shape index: {}]
  %s3 = inlined_call_operand.hbm [shape: f32[2,1,32], index: 3, kind: output, shape index: {}]
  %s4 = sld [smem:[#allocation0]]
  $region22: #{tpu_custom_call.1} parent=0
    _
  %s6 = ssub.s32 1, %s4
  %s7 = scalar_select 0, %s6, %s4
  $region1: #{tpu_custom_call.1} parent=0
    #allocation2 [shape = 'u8[1024]{0}', space=vmem, size = 0x400, scoped, tag = 'output window, operand 0, single buffered']
    #allocation3 [shape = 's32[1]{0}', space=sflag, size = 0x4, scoped, tag = 'scoped memory for tpu_custom_call.1']
    %8 = vsyncpa [#allocation3], 0
    // Predicated region
    $region2: #{tpu_custom_call.1} parent=1 // pred_check
      _
    $region3: #{tpu_custom_call.1} parent=1 // pred_check_branch
      %10 = sbr.rel (0) target = $region5
    $region4: #{tpu_custom_call.1} parent=1 // pred_region
      _
    $region5: #{tpu_custom_call.1} parent=1 // pred_fallthru
      _
    // Predicated region
    $region6: #{tpu_custom_call.1} parent=1 // pred_check
      _
    $region7: #{tpu_custom_call.1} parent=1 // pred_check_branch
      %12 = sbr.rel (0) target = $region9
    $region8: #{tpu_custom_call.1} parent=1 // pred_region
      _
    $region9: #{tpu_custom_call.1} parent=1 // pred_fallthru
      _
    // Predicated region
    $region10: #{tpu_custom_call.1} parent=1 // pred_check
      _
    $region11: #{tpu_custom_call.1} parent=1 // pred_check_branch
      %14 = sbr.rel (0) target = $region13
    $region12: #{tpu_custom_call.1} parent=1 // pred_region
      _
    $region13: #{tpu_custom_call.1} parent=1 // pred_fallthru
      _
    %v15 = vld [vmem:[%s0] sm:$0xff]
    %v16 = vld [vmem:[%s0 + $0x8] sm:$0xff]
    %v17 = vld [vmem:[%s1] sm:$0x1]
    %v19 = vlaneseq
    %v20 = vshrl.u32 %v19, 7
    %v21 = vsub.s32 0, %v20
    %v22 = vrot.slane %v17, %v21
    %v24 = vmul.f32 %v15, %v22
    %v25 = vmul.f32 %v16, %v22
    %vm26 = vcmask 261120
    %v27 = vsel %vm26, %v24, 0.0
    %28 = vadd.xlane.f32.xlu0 %v27
    %v29 = vpop.xlane.xlu0 %28
    %v30 = vsel %vm26, %v25, 0.0
    %31 = vadd.xlane.f32.xlu0 %v30
    %v32 = vpop.xlane.xlu0 %31
    %v33 = vld [vmem:[%s2] sm:$0xff]
    %v34 = vld [vmem:[%s2 + $0x8] sm:$0xff]
    %v35 = vadd.f32 %v29, %v33
    %v36 = vadd.f32 %v32, %v34
    %vm37 = vcmask 7168
    %v38 = vsel %vm37, %v35, -inf
    %v39 = vrot.slane %v38, 4
    %v40 = vmax.f32 %v38, %v39
    %v41 = vrot.slane %v40, 2
    %v42 = vmax.f32 %v40, %v41
    %v43 = vrot.slane %v42, 1
    %v44 = vmax.f32 %v42, %v43
    %v45 = vsel %vm37, %v36, -inf
    %v46 = vrot.slane %v45, 4
    %v47 = vmax.f32 %v45, %v46
    %v48 = vrot.slane %v47, 2
    %v49 = vmax.f32 %v47, %v48
    %v50 = vrot.slane %v49, 1
    %v51 = vmax.f32 %v49, %v50
    %v52 = vsub.f32 %v35, %v44
    %v53 = vsub.f32 %v36, %v51
    %v54 = vmul.f32 %v52, 1.442695
    %v55 = vpow.pop %v54
    %v56 = vmul.f32 %v53, 1.442695
    %v57 = vpow.pop %v56
    %v58 = vsel %vm37, %v55, 0.0
    %v59 = vrot.slane %v58, 4
    %v60 = vadd.f32 %v58, %v59
    %v61 = vrot.slane %v60, 2
    %v62 = vadd.f32 %v60, %v61
    %v63 = vrot.slane %v62, 1
    %v64 = vadd.f32 %v62, %v63
    %v65 = vsel %vm37, %v57, 0.0
    %v66 = vrot.slane %v65, 4
    %v67 = vadd.f32 %v65, %v66
    %v68 = vrot.slane %v67, 2
    %v69 = vadd.f32 %v67, %v68
    %v70 = vrot.slane %v69, 1
    %v71 = vadd.f32 %v69, %v70
    %73 = vset.pattern.permute.xlu0 0
    %74 = vperm.xlu0 %73, %v55
    %v75 = vpop.permute.xlu0 %74
    %78 = vset.pattern.permute.xlu0 0
    %79 = vperm.xlu0 %78, %v57
    %v80 = vpop.permute.xlu0 %79
    %v82 = vmul.f32 %v75, %v15
    %v83 = vmul.f32 %v80, %v16
    %v84 = vsel %vm26, %v82, 0.0
    %v85 = vrot.slane %v84, 4
    %v86 = vadd.f32 %v84, %v85
    %v87 = vrot.slane %v86, 2
    %v88 = vadd.f32 %v86, %v87
    %v89 = vrot.slane %v88, 1
    %v90 = vadd.f32 %v88, %v89
    %v91 = vsel %vm26, %v83, 0.0
    %v92 = vrot.slane %v91, 4
    %v93 = vadd.f32 %v91, %v92
    %v94 = vrot.slane %v93, 2
    %v95 = vadd.f32 %v93, %v94
    %v96 = vrot.slane %v95, 1
    %v97 = vadd.f32 %v95, %v96
    %v98 = vrcp.pop %v64
    %v99 = vrcp.pop %v71
    %101 = vset.pattern.permute.xlu0 0
    %102 = vperm.xlu0 %101, %v98
    %v103 = vpop.permute.xlu0 %102
    %106 = vset.pattern.permute.xlu0 0
    %107 = vperm.xlu0 %106, %v99
    %v108 = vpop.permute.xlu0 %107
    %v110 = vmul.f32 %v90, %v103
    %v111 = vmul.f32 %v97, %v108
    %vm112 = vcmask 253952
    %113 = vst.msk [vmem:[#allocation2] sm:$0x1] %vm112, %v110
    %114 = vst.msk [vmem:[#allocation2 + $0x1] sm:$0x1] %vm112, %v111
    // Predicated region
    $region14: #{tpu_custom_call.1} parent=1 // pred_check
      _
    $region15: #{tpu_custom_call.1} parent=1 // pred_check_branch
      %116 = sbr.rel (0) target = $region17
    $region16: #{tpu_custom_call.1} parent=1 // pred_region
      %s118 = ssub.s32 32, 32
      %119 = vsyncadd [#allocation3], %s118
      %s120 = sshll.u32 [#allocation2], 4
      %s121 = int_to_ptr.vmem [resolvable:$true] %s120
      %126 = dma.vmem_to_hbm [thread:$0]  %s121, 32, %s3, [#allocation3], 16, 16, 1
    $region17: #{tpu_custom_call.1} parent=1 // pred_fallthru
      _
    // Predicated region
    $region18: #{tpu_custom_call.1} parent=1 // pred_check
      _
    $region19: #{tpu_custom_call.1} parent=1 // pred_check_branch
      %128 = sbr.rel (0) target = $region21
    $region20: #{tpu_custom_call.1} parent=1 // pred_region
      %129 = dma.done [#allocation3], 32
    $region21: #{tpu_custom_call.1} parent=1 // pred_fallthru
      _
    %130 = vsyncpa [#allocation3], 1

</llo_original>
